<compile_context>
chip_gen: v7x
topology: tpu7x:2x2x1
jax: 0.10.0
libtpu: 0.0.40
codegen_flags: <defaults>
</compile_context>

<pallas_src>
import jax
import jax.numpy as jnp
from jax.experimental import pallas as pl
from jax.experimental.pallas import tpu as pltpu


def _pad8(x):
    return ((x + 7) // 8) * 8


def _choose_tile_n(N, per_n_bytes, budget_bytes=16 * 1024 * 1024, max_tn=2048):
    """Pick a lane-dense tile width TN along N (multiple of 128, VMEM-bounded)."""
    if N <= 128:
        return N  # full-extent block along the lane axis is always legal
    tn = min(max_tn, N, budget_bytes // max(per_n_bytes, 1))
    tn = max(128, (tn // 128) * 128)  # multiple of 128 -> unmasked lane-dense stores
    return tn


def _group_all_quat_kernel(xyz_ref, feat_ref, out_ref):
    # xyz_ref : (3, TN), feat_ref : (C, TN), out_ref : (C + 1, TN)
    xyz = xyz_ref[...].astype(jnp.float32)
    norm = jnp.sqrt(jnp.sum(xyz * xyz, axis=0, keepdims=True))  # (1, TN), f32
    # Shift features by one sublane in-register and emit ONE full, aligned,
    # lane-dense store (no masked vst on the dominant feature stream).
    out_ref[...] = jnp.concatenate(
        [norm.astype(out_ref.dtype), feat_ref[...]], axis=0
    )


def _norm_only_kernel(xyz_ref, out_ref):
    # xyz_ref : (TN, 3) in native layout, out_ref : (TN, 1)
    xyz = xyz_ref[...].astype(jnp.float32)
    out_ref[...] = jnp.sqrt(
        jnp.sum(xyz * xyz, axis=-1, keepdims=True)
    ).astype(out_ref.dtype)


def group_all_quat(xyz, new_xyz=None, features=None, use_xyz=True):
    """Pallas implementation of GroupAllQuat.forward.

    xyz:      (B, N, 3) float
    new_xyz:  ignored (kept for signature parity)
    features: (B, C, N) float or None
    returns:  (B, C+1, 1, N) if features is not None and use_xyz
              (B, C,   1, N) if features is not None and not use_xyz
              (B, 1,   1, N) if features is None
    """
    del new_xyz
    B, N, _ = xyz.shape
    xb = jnp.dtype(xyz.dtype).itemsize

    if features is not None and not use_xyz:
        # Pure reshape path; no compute to put in a kernel.
        return features[:, :, None, :]

    if features is None:
        # Norm-only path: keep xyz in native (B, N, 3) layout to avoid an extra
        # HBM transpose pass over xyz. Output (B, N, 1) is tiny; its reshape to
        # (B, 1, 1, N) is a free row-major reinterpretation.
        per_n = 2 * (128 * xb + 128 * xb)  # lane-padded xyz + out blocks, x2 buffers
        tn = _choose_tile_n(N, per_n)
        grid = (B, pl.cdiv(N, tn))
        out = pl.pallas_call(
            _norm_only_kernel,
            out_shape=jax.ShapeDtypeStruct((B, N, 1), xyz.dtype),
            grid=grid,
            in_specs=[
                pl.BlockSpec((pl.Squeezed(), tn, 3), lambda b, n: (b, n, 0)),
            ],
            out_specs=pl.BlockSpec((pl.Squeezed(), tn, 1), lambda b, n: (b, n, 0)),
            compiler_params=pltpu.CompilerParams(
                dimension_semantics=("parallel", "parallel"),
                vmem_limit_bytes=32 * 1024 * 1024,
            ),
            cost_estimate=pl.CostEstimate(
                flops=5 * B * N,
                transcendentals=B * N,
                bytes_accessed=4 * B * N * xb,
            ),
        )(xyz)
        return out.reshape(B, 1, 1, N)

    C = features.shape[1]
    fb = jnp.dtype(features.dtype).itemsize
    out_dtype = features.dtype

    # Per-N-column VMEM footprint (sublane-padded, double-buffered) drives TN.
    per_n = 2 * (_pad8(3) * xb + _pad8(C) * fb + _pad8(C + 1) * fb)
    tn = _choose_tile_n(N, per_n)
    grid = (B, pl.cdiv(N, tn))

    xyz_t = jnp.transpose(xyz, (0, 2, 1))  # (B, 3, N): N on the lane axis
    out = pl.pallas_call(
        _group_all_quat_kernel,
        out_shape=jax.ShapeDtypeStruct((B, C + 1, N), out_dtype),
        grid=grid,
        in_specs=[
            pl.BlockSpec((pl.Squeezed(), 3, tn), lambda b, n: (b, 0, n)),
            pl.BlockSpec((pl.Squeezed(), C, tn), lambda b, n: (b, 0, n)),
        ],
        out_specs=pl.BlockSpec((pl.Squeezed(), C + 1, tn), lambda b, n: (b, 0, n)),
        compiler_params=pltpu.CompilerParams(
            dimension_semantics=("parallel", "parallel"),
            vmem_limit_bytes=32 * 1024 * 1024,
        ),
        cost_estimate=pl.CostEstimate(
            flops=5 * B * N,
            transcendentals=B * N,
            bytes_accessed=B * N * (3 * xb + (2 * C + 1) * fb),
        ),
    )(xyz_t, features)
    return out[:, :, None, :]  # (B, C+1, 1, N)


def _reference(xyz, features=None, use_xyz=True):
    # Pure-JAX reference mirroring the PyTorch code.
    norm = jnp.sqrt(jnp.sum(xyz * xyz, axis=2, keepdims=True))  # (B, N, 1)
    nf = jnp.transpose(norm, (0, 2, 1))[:, :, None, :]          # (B, 1, 1, N)
    if features is not None:
        gf = features[:, :, None, :]                             # (B, C, 1, N)
        if use_xyz:
            return jnp.concatenate([nf, gf], axis=1)
        return gf
    return nf


if __name__ == "__main__":
    key = jax.random.PRNGKey(0)
    k1, k2, k3, k4 = jax.random.split(key, 4)

    # Lane-dense case (N multiple of 128).
    B, N, C = 2, 256, 8
    xyz = jax.random.normal(k1, (B, N, 3), dtype=jnp.float32)
    features = jax.random.normal(k2, (B, C, N), dtype=jnp.float32)

    out = jax.block_until_ready(group_all_quat(xyz, None, features, use_xyz=True))
    ref = _reference(xyz, features, use_xyz=True)
    assert out.shape == (B, C + 1, 1, N), out.shape
    assert jnp.allclose(out, ref, atol=1e-5, rtol=1e-5)

    # features=None branch (norm only), native-layout kernel.
    out_norm = jax.block_until_ready(group_all_quat(xyz, None, None))
    assert out_norm.shape == (B, 1, 1, N), out_norm.shape
    assert jnp.allclose(out_norm, _reference(xyz, None), atol=1e-5, rtol=1e-5)

    # Non-128-multiple N: exercises the cdiv grid + masked edge block.
    B2, N2, C2 = 2, 200, 4
    xyz2 = jax.random.normal(k3, (B2, N2, 3), dtype=jnp.float32)
    feat2 = jax.random.normal(k4, (B2, C2, N2), dtype=jnp.float32)
    out2 = jax.block_until_ready(group_all_quat(xyz2, None, feat2, use_xyz=True))
    assert out2.shape == (B2, C2 + 1, 1, N2), out2.shape
    assert jnp.allclose(out2, _reference(xyz2, feat2, use_xyz=True),
                        atol=1e-5, rtol=1e-5)

    # use_xyz=False path (pure reshape, no kernel).
    out3 = jax.block_until_ready(group_all_quat(xyz, None, features, use_xyz=False))
    assert jnp.allclose(out3, _reference(xyz, features, use_xyz=False))

    print("KERNEL_OK")
</pallas_src>

<mosaic_0001>
module attributes {stable_mosaic.version = 11 : i64} {
  func.func @_group_all_quat_kernel(%arg0: i32, %arg1: i32, %arg2: memref<1x3x256xf32, #tpu.memory_space<vmem>>, %arg3: memref<1x8x256xf32, #tpu.memory_space<vmem>>, %arg4: memref<1x9x256xf32, #tpu.memory_space<vmem>>) attributes {dimension_semantics = [#tpu.dimension_semantics<parallel>, #tpu.dimension_semantics<parallel>], iteration_bounds = array<i64: 2, 1>, scalar_prefetch = 0 : i64, scratch_operands = 0 : i64, tpu.core_type = #tpu.core_type<tc>, window_params = [{transform_indices = @transform_0, window_bounds = array<i64: 1, 3, 256>}, {transform_indices = @transform_1, window_bounds = array<i64: 1, 8, 256>}, {transform_indices = @transform_2, window_bounds = array<i64: 1, 9, 256>}]} {
    %c0 = arith.constant 0 : index
    %c0_0 = arith.constant 0 : index
    %c0_1 = arith.constant 0 : index
    %0 = vector.load %arg2[%c0, %c0_0, %c0_1] : memref<1x3x256xf32, #tpu.memory_space<vmem>>, vector<1x3x256xf32>
    %1 = vector.shape_cast %0 : vector<1x3x256xf32> to vector<3x256xf32>
    %2 = arith.mulf %1, %1 : vector<3x256xf32>
    %cst = arith.constant dense<0.000000e+00> : vector<256xf32>
    %3 = vector.multi_reduction <add>, %2, %cst [0] : vector<3x256xf32> to vector<256xf32>
    %4 = vector.shape_cast %3 : vector<256xf32> to vector<1x256xf32>
    %5 = math.sqrt %4 : vector<1x256xf32>
    %c0_2 = arith.constant 0 : index
    %c0_3 = arith.constant 0 : index
    %c0_4 = arith.constant 0 : index
    %6 = vector.load %arg3[%c0_2, %c0_3, %c0_4] : memref<1x8x256xf32, #tpu.memory_space<vmem>>, vector<1x8x256xf32>
    %7 = vector.shape_cast %6 : vector<1x8x256xf32> to vector<8x256xf32>
    %8 = tpu.concatenate %5, %7 in 0 : vector<1x256xf32>, vector<8x256xf32> -> vector<9x256xf32>
    %c0_5 = arith.constant 0 : index
    %c0_6 = arith.constant 0 : index
    %c0_7 = arith.constant 0 : index
    %9 = vector.load %arg4[%c0_5, %c0_6, %c0_7] : memref<1x9x256xf32, #tpu.memory_space<vmem>>, vector<1x9x256xf32>
    %10 = vector.shape_cast %9 : vector<1x9x256xf32> to vector<9x256xf32>
    %11 = vector.shape_cast %8 : vector<9x256xf32> to vector<1x9x256xf32>
    tpu.vector_store %arg4[%c0_5, %c0_6, %c0_7], %11 {strides = array<i32>} : memref<1x9x256xf32, #tpu.memory_space<vmem>>, vector<1x9x256xf32>,
    return
  }
  func.func @transform_0(%arg0: i32, %arg1: i32) -> (i32, i32, i32) {
    %c0_i32 = arith.constant 0 : i32
    %c0_i32_0 = arith.constant 0 : i32
    return %arg0, %c0_i32, %arg1 : i32, i32, i32
  }
  func.func @transform_1(%arg0: i32, %arg1: i32) -> (i32, i32, i32) {
    %c0_i32 = arith.constant 0 : i32
    %c0_i32_0 = arith.constant 0 : i32
    return %arg0, %c0_i32, %arg1 : i32, i32, i32
  }
  func.func @transform_2(%arg0: i32, %arg1: i32) -> (i32, i32, i32) {
    %c0_i32 = arith.constant 0 : i32
    %c0_i32_0 = arith.constant 0 : i32
    return %arg0, %c0_i32, %arg1 : i32, i32, i32
  }
}

</mosaic_0001>

<llo_original>
// kernel: tpu_custom_call.1
$region0: #{tpu_custom_call.1}
  #allocation0 [shape = 'u32[]', space=smem, size = 0x4, offset = 0x4, fixed_abs, tag = 'smem constant byte address 0x4 - core index']
  #allocation1 [shape = 'u32[144,128]{1,0:T(1,128)}', space=vmem, size = 0x12000, scoped, tag = 'internal scratch']
  %s0 = inlined_call_operand.vmem [shape: f32[2,3,256], index: 0, kind: input, shape index: {}]
  %s1 = inlined_call_operand.hbm [shape: f32[2,8,256], index: 1, kind: input, shape index: {}]
  %s2 = inlined_call_operand.vmem [shape: f32[2,9,256], index: 2, kind: output, shape index: {}]
  %s3 = sld [smem:[#allocation0]]
  $region45: #{tpu_custom_call.1} parent=0
    _
  %s5 = ssub.s32 1, %s3
  %s6 = scalar_select 0, %s5, %s3
  $region1: #{tpu_custom_call.1} parent=0
    #allocation2 [shape = 'u8[16384]{0}', space=vmem, size = 0x4000, scoped, tag = 'input window, operand 1']
    #allocation3 [shape = 's32[2]{0}', space=sflag, size = 0x8, scoped, tag = 'scoped memory for tpu_custom_call.1']
    %7 = vsyncpa [#allocation3], 0
    %s8 = scalar_lea.sflag [#allocation3], 1
    %9 = vsyncpa %s8, 0
    loop: start=0, step=1, limit=4
    $region2: #{tpu_custom_call.1} parent=1 // loop_pre_header
      _
    $region3: #{tpu_custom_call.1} parent=1 // loop_header
      %s11 = sphi 0, %s15
      %p12 = scmp.ge.s32.totalorder %s11, 4
      %s18 = sphi 0, %s30
      %s19 = sphi 0, %s26
      %s20 = sphi 0, %s18
      %s21 = sphi 0, %s19
      %s22 = sphi 0, %s20
      %s23 = sphi 0, %s21
      %s35 = sphi 0, %s37
      %s38 = sphi 0, %s35
      %s39 = sphi 0, %s38
      %s55 = sphi 0, %s39
      %s63 = sphi 0, %s65
      %s66 = sphi 0, %s63
      %s67 = sphi 0, %s66
      %s83 = sphi 0, %s67
      %s91 = sphi 0, %s93
      %s94 = sphi 0, %s91
      %s95 = sphi 0, %s94
      %s111 = sphi 0, %s95
    $region4: #{tpu_custom_call.1} parent=1 // loop_header_branch
      %14 = sbr.rel (%p12) target = $region8
    $region5: #{tpu_custom_call.1} parent=1 // loop_body
      %s16 = ssub.s32 %s11, 1
      %s17 = ssub.s32 %s11, 2
      %s24 = sadd.s32 1, %s19
      %p25 = scmp.ge.s32.totalorder %s24, 1
      %s26 = scalar_select %p25, 0, %s24
      %s27 = sadd.s32 1, %s18
      %s28 = scalar_select %p25, %s27, %s18
      %p29 = scmp.ge.s32.totalorder %s28, 2
      %s30 = scalar_select %p29, 0, %s28
      %s31 = ssub.s32 %s18, %s30
      %s32 = ssub.s32 %s19, %s26
      %s33 = sor.u32 %s31, %s32
      %p34 = scmp.eq.s32.totalorder %s33, 0
      %s36 = sadd.s32 %s35, 1
      %s37 = scalar_select %p34, %s35, %s36
      %p40 = pneg %p34
      %p41 = scmp.eq.s32.totalorder %s11, 1
      %p42 = por %p40, %p41
      %p43 = scmp.ne.s32.totalorder %s35, %s38
      %p44 = scmp.eq.s32.totalorder %s11, 0
      %p45 = por %p43, %p44
      %p46 = scmp.ne.s32.totalorder %s35, %s38
      %p47 = scmp.eq.s32.totalorder %s16, 1
      %p48 = por %p46, %p47
      %p49 = scmp.ne.s32.totalorder %s38, %s39
      %p50 = scmp.eq.s32.totalorder %s16, 0
      %p51 = por %p49, %p50
      %p52 = scmp.ne.s32.totalorder %s38, %s39
      %p53 = scmp.eq.s32.totalorder %s17, 1
      %p54 = por %p52, %p53
      %p56 = scmp.ne.s32.totalorder %s39, %s55
      %p57 = scmp.eq.s32.totalorder %s17, 0
      %p58 = por %p56, %p57
      %s59 = ssub.s32 %s18, %s30
      %s60 = ssub.s32 %s19, %s26
      %s61 = sor.u32 %s59, %s60
      %p62 = scmp.eq.s32.totalorder %s61, 0
      %s64 = sadd.s32 %s63, 1
      %s65 = scalar_select %p62, %s63, %s64
      %p68 = pneg %p62
      %p69 = scmp.eq.s32.totalorder %s11, 1
      %p70 = por %p68, %p69
      %p71 = scmp.ne.s32.totalorder %s63, %s66
      %p72 = scmp.eq.s32.totalorder %s11, 0
      %p73 = por %p71, %p72
      %p74 = scmp.ne.s32.totalorder %s63, %s66
      %p75 = scmp.eq.s32.totalorder %s16, 1
      %p76 = por %p74, %p75
      %p77 = scmp.ne.s32.totalorder %s66, %s67
      %p78 = scmp.eq.s32.totalorder %s16, 0
      %p79 = por %p77, %p78
      %p80 = scmp.ne.s32.totalorder %s66, %s67
      %p81 = scmp.eq.s32.totalorder %s17, 1
      %p82 = por %p80, %p81
      %p84 = scmp.ne.s32.totalorder %s67, %s83
      %p85 = scmp.eq.s32.totalorder %s17, 0
      %p86 = por %p84, %p85
      %s87 = ssub.s32 %s18, %s30
      %s88 = ssub.s32 %s19, %s26
      %s89 = sor.u32 %s87, %s88
      %p90 = scmp.eq.s32.totalorder %s89, 0
      %s92 = sadd.s32 %s91, 1
      %s93 = scalar_select %p90, %s91, %s92
      %p96 = pneg %p90
      %p97 = scmp.eq.s32.totalorder %s11, 1
      %p98 = por %p96, %p97
      %p99 = scmp.ne.s32.totalorder %s91, %s94
      %p100 = scmp.eq.s32.totalorder %s11, 0
      %p101 = por %p99, %p100
      %p102 = scmp.ne.s32.totalorder %s91, %s94
      %p103 = scmp.eq.s32.totalorder %s16, 1
      %p104 = por %p102, %p103
      %p105 = scmp.ne.s32.totalorder %s94, %s95
      %p106 = scmp.eq.s32.totalorder %s16, 0
      %p107 = por %p105, %p106
      %p108 = scmp.ne.s32.totalorder %s94, %s95
      %p109 = scmp.eq.s32.totalorder %s17, 1
      %p110 = por %p108, %p109
      %p112 = scmp.ne.s32.totalorder %s95, %s111
      %p113 = scmp.eq.s32.totalorder %s17, 0
      %p114 = por %p112, %p113
      %p115 = scmp.le.s32.totalorder 1, %s11
      %p116 = scmp.lt.s32.totalorder %s11, 3
      %p117 = pnand %p115, %p116
      %p118 = pneg %p117
      // Predicated region
      $region9: #{tpu_custom_call.1} parent=5 // pred_check
        _
      $region10: #{tpu_custom_call.1} parent=5 // pred_check_branch
        %120 = sbr.rel (%p117) target = $region12
      $region11: #{tpu_custom_call.1} parent=5 // pred_region
        %s121 = ssub.s32 %s11, 1
      $region12: #{tpu_custom_call.1} parent=5 // pred_fallthru
        _
      %p122 = scmp.lt.s32.totalorder %s11, 2
      // Predicated region
      $region13: #{tpu_custom_call.1} parent=5 // pred_check
        %p123 = pneg %p122
      $region14: #{tpu_custom_call.1} parent=5 // pred_check_branch
        %125 = sbr.rel (%p123) target = $region16
      $region15: #{tpu_custom_call.1} parent=5 // pred_region
        // Predicated region
        $region17: #{tpu_custom_call.1} parent=15 // pred_check
          %p126 = pneg %p45
        $region18: #{tpu_custom_call.1} parent=15 // pred_check_branch
          %128 = sbr.rel (%p126) target = $region20
        $region19: #{tpu_custom_call.1} parent=15 // pred_region
          %s129 = smul.u32 2, %s19
          %p130 = scmp.lt.s32.totalorder %s18, 1
          %s131 = scalar_select %p130, %s18, 1
          %p132 = scmp.lt.s32.totalorder %s129, 1
          %s133 = scalar_select %p132, %s129, 1
          %s134 = smul.addr %s131, 2
          %s135 = sadd.s32 %s133, %s134
          %s136 = smul.addr %s135, 4
          %s137 = scalar_lea.vmem %s0, %s136
          %s138 = smul.u32 2, %s19
        $region20: #{tpu_custom_call.1} parent=15 // pred_fallthru
          _
        // Predicated region
        $region21: #{tpu_custom_call.1} parent=15 // pred_check
          %p139 = pneg %p73
        $region22: #{tpu_custom_call.1} parent=15 // pred_check_branch
          %141 = sbr.rel (%p139) target = $region24
        $region23: #{tpu_custom_call.1} parent=15 // pred_region
          %s142 = sand.u32 %s63, 1
          %s143 = scalar_lea.sflag [#allocation3], %s142
          %s144 = sand.u32 %s63, 1
          %s145 = smul.addr %s144, 16
          %s146 = scalar_lea.vmem [#allocation2], %s145
          %s147 = smul.u32 2, %s19
          %s149 = ssub.s32 256, 256
          %150 = vsyncadd %s143, %s149
          %s151 = smul.addr %s18, 2
          %s152 = sadd.s32 %s147, %s151
          %s153 = smul.addr %s152, 128
          %s154 = scalar_lea.hbm %s1, %s153
          %s156 = sshll.u32 %s146, 4
          %s157 = int_to_ptr.vmem [resolvable:$true] %s156
          %159 = dma.hbm_to_vmem [thread:$0]  %s154, 256, %s157, %s143
        $region24: #{tpu_custom_call.1} parent=15 // pred_fallthru
          _
      $region16: #{tpu_custom_call.1} parent=5 // pred_fallthru
        _
      %p160 = scmp.le.s32.totalorder 1, %s11
      %p161 = scmp.lt.s32.totalorder %s11, 3
      %p162 = pnand %p160, %p161
      %p163 = pneg %p162
      // Predicated region
      $region25: #{tpu_custom_call.1} parent=5 // pred_check
        _
      $region26: #{tpu_custom_call.1} parent=5 // pred_check_branch
        %165 = sbr.rel (%p162) target = $region28
      $region27: #{tpu_custom_call.1} parent=5 // pred_region
        %s166 = ssub.s32 %s11, 1
        %s167 = sand.u32 %s66, 1
        %s168 = scalar_lea.sflag [#allocation3], %s167
        %s169 = sand.u32 %s66, 1
        %s170 = smul.addr %s169, 16
        %s171 = scalar_lea.vmem [#allocation2], %s170
        // Predicated region
        $region29: #{tpu_custom_call.1} parent=27 // pred_check
          %p172 = pneg %p79
        $region30: #{tpu_custom_call.1} parent=27 // pred_check_branch
          %174 = sbr.rel (%p172) target = $region32
        $region31: #{tpu_custom_call.1} parent=27 // pred_region
          %175 = dma.done %s168, 256
        $region32: #{tpu_custom_call.1} parent=27 // pred_fallthru
          _
        %s176 = smul.u32 2, %s21
        %p177 = scmp.lt.s32.totalorder %s20, 1
        %s178 = scalar_select %p177, %s20, 1
        %p179 = scmp.lt.s32.totalorder %s176, 1
        %s180 = scalar_select %p179, %s176, 1
        %s181 = smul.addr %s178, 2
        %s182 = sadd.s32 %s180, %s181
        %s183 = smul.addr %s182, 4
        %s184 = scalar_lea.vmem %s0, %s183
        %p185 = pneg %p51
        %p186 = pneg %p48
        %s187 = sand.u32 %s66, 1
        %s188 = scalar_lea.sflag [#allocation3], %s187
        %s189 = sand.u32 %s66, 1
        %s190 = smul.addr %s189, 16
        %s191 = scalar_lea.vmem [#allocation2], %s190
        %p192 = pneg %p79
        %p193 = pneg %p76
        %p194 = pneg %p107
        %p195 = pneg %p104
        %s196 = smul.u32 2, %s21
        %p197 = scmp.lt.s32.totalorder %s20, 1
        %s198 = scalar_select %p197, %s20, 1
        %p199 = scmp.lt.s32.totalorder %s196, 1
        %s200 = scalar_select %p199, %s196, 1
        %s201 = smul.addr %s198, 4
        %s202 = sadd.s32 %s200, %s201
        %s203 = smul.addr %s202, 8
        %s204 = scalar_lea.vmem %s2, %s203
        %s205 = smul.u32 2, %s21
        %p206 = scmp.lt.s32.totalorder %s20, 1
        %s207 = scalar_select %p206, %s20, 1
        %p208 = scmp.lt.s32.totalorder %s205, 1
        %s209 = scalar_select %p208, %s205, 1
        %s210 = smul.addr %s207, 2
        %s211 = sadd.s32 %s209, %s210
        %s212 = smul.addr %s211, 4
        %s213 = scalar_lea.vmem %s0, %s212
        %s214 = smul.u32 2, %s21
        %s215 = smul.u32 2, %s21
        %s216 = smul.u32 2, %s21
        %p217 = scmp.lt.s32.totalorder %s20, 1
        %s218 = scalar_select %p217, %s20, 1
        %p219 = scmp.lt.s32.totalorder %s216, 1
        %s220 = scalar_select %p219, %s216, 1
        %s221 = smul.addr %s218, 4
        %s222 = sadd.s32 %s220, %s221
        %s223 = smul.addr %s222, 8
        %s224 = scalar_lea.vmem %s2, %s223
        %s225 = smul.u32 2, %s21
        %v226 = vld [vmem:[%s213] sm:$0x77]
        %v227 = vmul.f32 %v226, %v226
        %v229 = vcombine.high %v227, %v227
        %vm231 = vcmask 1042432
        %v232 = vsel %vm231, %v227, 0.0
        %v233 = vrot.slane %v232, 4
        %v234 = vadd.f32 %v232, %v233
        %v235 = vrot.slane %v234, 2
        %v236 = vadd.f32 %v234, %v235
        %v237 = vrot.slane %v236, 1
        %v238 = vadd.f32 %v236, %v237
        %v239 = vsel %vm231, %v229, 0.0
        %v240 = vrot.slane %v239, 4
        %v241 = vadd.f32 %v239, %v240
        %v242 = vrot.slane %v241, 2
        %v243 = vadd.f32 %v241, %v242
        %v244 = vrot.slane %v243, 1
        %v245 = vadd.f32 %v243, %v244
        %v246 = vrsqrt.pop %v238
        %v247 = vmul.f32 %v238, %v246
        %vm248 = vcmp.eq.f32.partialorder %v238, inf
        %v249 = vsel %vm248, %v238, %v247
        %vm250 = vcmp.eq.f32.partialorder %v238, 0.0
        %v251 = vand.u32 %v238, 2147483648
        %v252 = vsel %vm250, %v251, %v249
        %v253 = vrsqrt.pop %v245
        %v254 = vmul.f32 %v245, %v253
        %vm255 = vcmp.eq.f32.partialorder %v245, inf
        %v256 = vsel %vm255, %v245, %v254
        %vm257 = vcmp.eq.f32.partialorder %v245, 0.0
        %v258 = vand.u32 %v245, 2147483648
        %v259 = vsel %vm257, %v258, %v256
        %v260 = vld [vmem:[%s171] sm:$0xff]
        %v261 = vld [vmem:[%s171 + $0x8] sm:$0xff]
        %v264 = vrot.slane %v260, 7
        %v265 = vrot.slane %v261, 7
        %vm268 = vcmask 1040384
        %v269 = vsel %vm268, %v252, %v264
        %v270 = vsel %vm268, %v259, %v265
        %271 = vst [vmem:[%s224] sm:$0xff] %v269
        %272 = vst [vmem:[%s224 + $0x8] sm:$0xff] %v270
        %273 = vst [vmem:[%s224 + $0x10] sm:$0x1] %v264
        %274 = vst [vmem:[%s224 + $0x18] sm:$0x1] %v265
        %s275 = smul.u32 2, %s21
        %p276 = scmp.lt.s32.totalorder %s20, 1
        %s277 = scalar_select %p276, %s20, 1
        %p278 = scmp.lt.s32.totalorder %s275, 1
        %s279 = scalar_select %p278, %s275, 1
        %s280 = smul.addr %s277, 4
        %s281 = sadd.s32 %s279, %s280
        %s282 = smul.addr %s281, 8
        %s283 = scalar_lea.vmem %s2, %s282
        // Predicated region
        $region33: #{tpu_custom_call.1} parent=27 // pred_check
          %p284 = pneg %p104
        $region34: #{tpu_custom_call.1} parent=27 // pred_check_branch
          %286 = sbr.rel (%p284) target = $region36
        $region35: #{tpu_custom_call.1} parent=27 // pred_region
          %s287 = smul.u32 2, %s21
        $region36: #{tpu_custom_call.1} parent=27 // pred_fallthru
          _
      $region28: #{tpu_custom_call.1} parent=5 // pred_fallthru
        _
      %p288 = scmp.le.s32.totalorder 2, %s11
      // Predicated region
      $region37: #{tpu_custom_call.1} parent=5 // pred_check
        %p289 = pneg %p288
      $region38: #{tpu_custom_call.1} parent=5 // pred_check_branch
        %291 = sbr.rel (%p289) target = $region40
      $region39: #{tpu_custom_call.1} parent=5 // pred_region
        %s292 = ssub.s32 %s11, 2
        // Predicated region
        $region41: #{tpu_custom_call.1} parent=39 // pred_check
          %p293 = pneg %p110
        $region42: #{tpu_custom_call.1} parent=39 // pred_check_branch
          %295 = sbr.rel (%p293) target = $region44
        $region43: #{tpu_custom_call.1} parent=39 // pred_region
          %s296 = smul.u32 2, %s23
          %p297 = scmp.lt.s32.totalorder %s22, 1
          %s298 = scalar_select %p297, %s22, 1
          %p299 = scmp.lt.s32.totalorder %s296, 1
          %s300 = scalar_select %p299, %s296, 1
          %s301 = smul.addr %s298, 4
          %s302 = sadd.s32 %s300, %s301
          %s303 = smul.addr %s302, 8
          %s304 = scalar_lea.vmem %s2, %s303
        $region44: #{tpu_custom_call.1} parent=39 // pred_fallthru
          _
      $region40: #{tpu_custom_call.1} parent=5 // pred_fallthru
        _
    $region6: #{tpu_custom_call.1} parent=1 // loop_footer
      %s15 = sadd.s32 1, %s11
    $region7: #{tpu_custom_call.1} parent=1 // loop_footer_branch
      %10 = sbr.rel target = $region3
    $region8: #{tpu_custom_call.1} parent=1 // loop_exit
      _
    %305 = vsyncpa [#allocation3], 1
    %s306 = scalar_lea.sflag [#allocation3], 1
    %307 = vsyncpa %s306, 1

</llo_original>
